<compile_context>
chip_gen: v5e
topology: v5e:2x2
jax: 0.10.0
libtpu: 0.0.40
codegen_flags: <defaults>
</compile_context>

<pallas_src>
import numpy as np
import jax
import jax.numpy as jnp
from jax.experimental import pallas as pl
from jax.experimental.pallas import tpu as pltpu


def iwt_kernel(m_ref, x_ref, o_ref):
    # m_ref: (4, GW, 4*GW) folded butterfly + interleave constants (+-0.5)
    # x_ref: (4, rb, GW)   the 4 wavelet bands for rb grouped rows
    # o_ref: (rb, 4*GW)    fully interleaved, lane-dense output rows
    x = x_ref[...]
    if x.dtype != jnp.float32:            # trace-time check; no-op for f32 input
        x = x.astype(jnp.float32)
    m = m_ref[...]
    acc = jnp.dot(x[0], m[0], preferred_element_type=jnp.float32)
    acc = acc + jnp.dot(x[1], m[1], preferred_element_type=jnp.float32)
    acc = acc + jnp.dot(x[2], m[2], preferred_element_type=jnp.float32)
    acc = acc + jnp.dot(x[3], m[3], preferred_element_type=jnp.float32)
    o_ref[...] = acc                       # single wide store, no concat temp


def _fold_mats(W, G):
    """Four (G*W, 4*G*W) constants folding the /2, the +- butterfly, the even/odd
    column interleave and the even/odd row placement.

    For group slot k and input column j:
      out col = k*4W + pr*2W + 2j + pc  gets  0.5 * sign(band, pr, pc) * x_band[k*W+j]
    """
    GW = G * W
    mats = np.zeros((4, GW, 4 * GW), np.float32)
    k = np.arange(G)[:, None]                      # (G, 1)
    j = np.arange(W)[None, :]                      # (1, W)
    cin = (k * W + j).reshape(-1)                  # (GW,)
    for pr in (0, 1):                              # output row parity
        for pc in (0, 1):                          # output col parity
            cout = (k * 4 * W + pr * 2 * W + 2 * j + pc).reshape(-1)
            signs = (1.0,                                   # x1
                     1.0 if pc == 1 else -1.0,              # x2
                     1.0 if pr == 1 else -1.0,              # x3
                     1.0 if pr == pc else -1.0)             # x4
            for band in range(4):
                mats[band, cin, cout] = 0.5 * signs[band]
    return jnp.asarray(mats)


def _pick_group(rows, W):
    """Smallest G with rows % G == 0 and G*W >= 32 (=> output row >= 128 lanes).
    Falls back to 1 (masked narrow stores) if no small divisor exists."""
    if W >= 32 or rows <= 1:
        return 1
    need = -(-32 // W)                     # ceil(32 / W)
    for g in range(need, min(rows, 64) + 1):
        if rows % g == 0:
            return g
    return 1


def _pick_rows(grows, GW, in_itemsize):
    """Row chunk so one input block + one f32 output block ~ 6 MiB.  Pallas
    double-buffers both => ~12 MiB VMEM, inside the 32 MiB scoped limit on every
    generation (incl. v7x).  Always a multiple of 8, or the full extent."""
    bytes_per_row = 4 * GW * in_itemsize + 4 * GW * 4
    rb = (6 << 20) // max(1, bytes_per_row)
    rb = max(8, (rb // 8) * 8)
    return grows if rb >= grows else rb


def iwt(x):
    """Pallas implementation of iwt_init: (B, 4C, H, W) -> (B, C, 2H, 2W) f32."""
    B, C4, H, W = x.shape
    assert C4 % 4 == 0, "input channels must be divisible by 4"
    C = C4 // 4
    rows = C * H

    G = _pick_group(rows, W)
    GW = G * W
    grows = rows // G

    xv = x.reshape(B, 4, grows, GW)        # free contiguous view
    mats = _fold_mats(W, G)

    in_itemsize = jnp.dtype(x.dtype).itemsize
    rb = _pick_rows(grows, GW, in_itemsize)
    n_chunks = pl.cdiv(grows, rb)          # ragged last block handled by Pallas

    flops = 32 * B * grows * GW * GW       # 4 matmuls of (rb,GW)@(GW,4GW)
    bytes_accessed = (x.size * in_itemsize
                      + B * grows * 4 * GW * 4    # f32 output
                      + mats.size * 4)            # constants

    out = pl.pallas_call(
        iwt_kernel,
        out_shape=jax.ShapeDtypeStruct((B, grows, 4 * GW), jnp.float32),
        grid=(B, n_chunks),
        in_specs=[
            pl.BlockSpec((4, GW, 4 * GW), lambda b, rr: (0, 0, 0)),
            pl.BlockSpec((None, 4, rb, GW), lambda b, rr: (b, 0, rr, 0)),
        ],
        out_specs=pl.BlockSpec((None, rb, 4 * GW), lambda b, rr: (b, rr, 0)),
        compiler_params=pltpu.CompilerParams(
            dimension_semantics=("parallel", "parallel"),
            vmem_limit_bytes=32 * 1024 * 1024),
        cost_estimate=pl.CostEstimate(
            flops=flops, transcendentals=0, bytes_accessed=bytes_accessed),
    )(mats, xv)

    # Pure contiguous view: out flat index per batch
    #   (gr*G + k)*4W + pr*2W + 2j + pc == c*(2H*2W) + (2i+pr)*2W + (2j+pc)
    return out.reshape(B, C, 2 * H, 2 * W)


def iwt_ref(x):
    """Pure-JAX reference mirroring the PyTorch iwt_init."""
    B, C4, H, W = x.shape
    C = C4 // 4
    x1 = x[:, 0 * C:1 * C].astype(jnp.float32) / 2
    x2 = x[:, 1 * C:2 * C].astype(jnp.float32) / 2
    x3 = x[:, 2 * C:3 * C].astype(jnp.float32) / 2
    x4 = x[:, 3 * C:4 * C].astype(jnp.float32) / 2
    h = jnp.zeros((B, C, 2 * H, 2 * W), jnp.float32)
    h = h.at[:, :, 0::2, 0::2].set(x1 - x2 - x3 + x4)
    h = h.at[:, :, 1::2, 0::2].set(x1 - x2 + x3 - x4)
    h = h.at[:, :, 0::2, 1::2].set(x1 + x2 - x3 - x4)
    h = h.at[:, :, 1::2, 1::2].set(x1 + x2 + x3 + x4)
    return h


if __name__ == "__main__":
    key = jax.random.PRNGKey(0)
    B, C4, H, W = 2, 8, 16, 16   # 4*C = 8 -> C = 2, output (2, 2, 32, 32)
    x = jax.random.normal(key, (B, C4, H, W), dtype=jnp.float32)

    out = jax.block_until_ready(iwt(x))
    ref = jax.block_until_ready(iwt_ref(x))

    assert out.shape == (B, C4 // 4, 2 * H, 2 * W), out.shape
    assert out.dtype == jnp.float32
    assert jnp.allclose(out, ref, atol=1e-5, rtol=1e-5), "mismatch vs reference"

    print("KERNEL_OK")
</pallas_src>

<mosaic_0001>
module attributes {stable_mosaic.version = 11 : i64} {
  func.func @iwt_kernel(%arg0: i32, %arg1: i32, %arg2: memref<4x32x128xf32, #tpu.memory_space<vmem>>, %arg3: memref<1x4x16x32xf32, #tpu.memory_space<vmem>>, %arg4: memref<1x16x128xf32, #tpu.memory_space<vmem>>) attributes {dimension_semantics = [#tpu.dimension_semantics<parallel>, #tpu.dimension_semantics<parallel>], iteration_bounds = array<i64: 2, 1>, scalar_prefetch = 0 : i64, scratch_operands = 0 : i64, tpu.core_type = #tpu.core_type<tc>, window_params = [{pipeline_mode = #tpu.pipeline_mode<synchronous>, transform_indices = @transform_0, window_bounds = array<i64: 4, 32, 128>}, {transform_indices = @transform_1, window_bounds = array<i64: 1, 4, 16, 32>}, {transform_indices = @transform_2, window_bounds = array<i64: 1, 16, 128>}]} {
    %c0 = arith.constant 0 : index
    %c0_0 = arith.constant 0 : index
    %c0_1 = arith.constant 0 : index
    %c0_2 = arith.constant 0 : index
    %0 = vector.load %arg3[%c0, %c0_0, %c0_1, %c0_2] : memref<1x4x16x32xf32, #tpu.memory_space<vmem>>, vector<1x4x16x32xf32>
    %1 = vector.shape_cast %0 : vector<1x4x16x32xf32> to vector<4x16x32xf32>
    %c0_3 = arith.constant 0 : index
    %c0_4 = arith.constant 0 : index
    %c0_5 = arith.constant 0 : index
    %2 = vector.load %arg2[%c0_3, %c0_4, %c0_5] : memref<4x32x128xf32, #tpu.memory_space<vmem>>, vector<4x32x128xf32>
    %3 = vector.extract_strided_slice %1 {offsets = [0, 0, 0], sizes = [1, 16, 32], strides = [1, 1, 1]} : vector<4x16x32xf32> to vector<1x16x32xf32>
    %4 = vector.shape_cast %3 : vector<1x16x32xf32> to vector<16x32xf32>
    %5 = vector.extract_strided_slice %2 {offsets = [0, 0, 0], sizes = [1, 32, 128], strides = [1, 1, 1]} : vector<4x32x128xf32> to vector<1x32x128xf32>
    %6 = vector.shape_cast %5 : vector<1x32x128xf32> to vector<32x128xf32>
    %cst = arith.constant dense<0.000000e+00> : vector<16x128xf32>
    %7 = tpu.matmul %4, %6, %cst {dimension_numbers = #tpu.dot_dimension_numbers<[1], [0], [0], [1], [0, 0, 1, 1], [], []>} : vector<16x32xf32>, vector<32x128xf32>, vector<16x128xf32> -> vector<16x128xf32>
    %8 = vector.extract_strided_slice %1 {offsets = [1, 0, 0], sizes = [1, 16, 32], strides = [1, 1, 1]} : vector<4x16x32xf32> to vector<1x16x32xf32>
    %9 = vector.shape_cast %8 : vector<1x16x32xf32> to vector<16x32xf32>
    %10 = vector.extract_strided_slice %2 {offsets = [1, 0, 0], sizes = [1, 32, 128], strides = [1, 1, 1]} : vector<4x32x128xf32> to vector<1x32x128xf32>
    %11 = vector.shape_cast %10 : vector<1x32x128xf32> to vector<32x128xf32>
    %cst_6 = arith.constant dense<0.000000e+00> : vector<16x128xf32>
    %12 = tpu.matmul %9, %11, %cst_6 {dimension_numbers = #tpu.dot_dimension_numbers<[1], [0], [0], [1], [0, 0, 1, 1], [], []>} : vector<16x32xf32>, vector<32x128xf32>, vector<16x128xf32> -> vector<16x128xf32>
    %13 = arith.addf %7, %12 : vector<16x128xf32>
    %14 = vector.extract_strided_slice %1 {offsets = [2, 0, 0], sizes = [1, 16, 32], strides = [1, 1, 1]} : vector<4x16x32xf32> to vector<1x16x32xf32>
    %15 = vector.shape_cast %14 : vector<1x16x32xf32> to vector<16x32xf32>
    %16 = vector.extract_strided_slice %2 {offsets = [2, 0, 0], sizes = [1, 32, 128], strides = [1, 1, 1]} : vector<4x32x128xf32> to vector<1x32x128xf32>
    %17 = vector.shape_cast %16 : vector<1x32x128xf32> to vector<32x128xf32>
    %cst_7 = arith.constant dense<0.000000e+00> : vector<16x128xf32>
    %18 = tpu.matmul %15, %17, %cst_7 {dimension_numbers = #tpu.dot_dimension_numbers<[1], [0], [0], [1], [0, 0, 1, 1], [], []>} : vector<16x32xf32>, vector<32x128xf32>, vector<16x128xf32> -> vector<16x128xf32>
    %19 = arith.addf %13, %18 : vector<16x128xf32>
    %20 = vector.extract_strided_slice %1 {offsets = [3, 0, 0], sizes = [1, 16, 32], strides = [1, 1, 1]} : vector<4x16x32xf32> to vector<1x16x32xf32>
    %21 = vector.shape_cast %20 : vector<1x16x32xf32> to vector<16x32xf32>
    %22 = vector.extract_strided_slice %2 {offsets = [3, 0, 0], sizes = [1, 32, 128], strides = [1, 1, 1]} : vector<4x32x128xf32> to vector<1x32x128xf32>
    %23 = vector.shape_cast %22 : vector<1x32x128xf32> to vector<32x128xf32>
    %cst_8 = arith.constant dense<0.000000e+00> : vector<16x128xf32>
    %24 = tpu.matmul %21, %23, %cst_8 {dimension_numbers = #tpu.dot_dimension_numbers<[1], [0], [0], [1], [0, 0, 1, 1], [], []>} : vector<16x32xf32>, vector<32x128xf32>, vector<16x128xf32> -> vector<16x128xf32>
    %25 = arith.addf %19, %24 : vector<16x128xf32>
    %c0_9 = arith.constant 0 : index
    %c0_10 = arith.constant 0 : index
    %c0_11 = arith.constant 0 : index
    %26 = vector.load %arg4[%c0_9, %c0_10, %c0_11] : memref<1x16x128xf32, #tpu.memory_space<vmem>>, vector<1x16x128xf32>
    %27 = vector.shape_cast %26 : vector<1x16x128xf32> to vector<16x128xf32>
    %28 = vector.shape_cast %25 : vector<16x128xf32> to vector<1x16x128xf32>
    tpu.vector_store %arg4[%c0_9, %c0_10, %c0_11], %28 {strides = array<i32>} : memref<1x16x128xf32, #tpu.memory_space<vmem>>, vector<1x16x128xf32>,
    return
  }
  func.func @transform_0(%arg0: i32, %arg1: i32) -> (i32, i32, i32) {
    %c0_i32 = arith.constant 0 : i32
    %c0_i32_0 = arith.constant 0 : i32
    %c0_i32_1 = arith.constant 0 : i32
    %c0_i32_2 = arith.constant 0 : i32
    return %c0_i32, %c0_i32_0, %c0_i32_1 : i32, i32, i32
  }
  func.func @transform_1(%arg0: i32, %arg1: i32) -> (i32, i32, i32, i32) {
    %c0_i32 = arith.constant 0 : i32
    %c0_i32_0 = arith.constant 0 : i32
    %c0_i32_1 = arith.constant 0 : i32
    return %arg0, %c0_i32, %arg1, %c0_i32_0 : i32, i32, i32, i32
  }
  func.func @transform_2(%arg0: i32, %arg1: i32) -> (i32, i32, i32) {
    %c0_i32 = arith.constant 0 : i32
    %c0_i32_0 = arith.constant 0 : i32
    return %arg0, %arg1, %c0_i32 : i32, i32, i32
  }
}

</mosaic_0001>

<llo_original>
// kernel: tpu_custom_call.1
$region0: #{tpu_custom_call.1}
  #allocation0 [shape = 'u32[]', space=smem, size = 0x4, offset = 0x4, fixed_abs, tag = 'smem constant byte address 0x4 - core index']
  #allocation1 [shape = 'u32[72,128]{1,0:T(1,128)}', space=vmem, size = 0x9000, scoped, tag = 'internal scratch']
  %s0 = inlined_call_operand.hbm [shape: f32[4,32,128], index: 0, kind: input, shape index: {}]
  %s1 = inlined_call_operand.hbm [shape: f32[2,4,16,32], index: 1, kind: input, shape index: {}]
  %s2 = inlined_call_operand.hbm [shape: f32[2,16,128], index: 2, kind: output, shape index: {}]
  %s3 = sld [smem:[#allocation0]]
  $region49: #{tpu_custom_call.1} parent=0
    _
  %s5 = ssub.s32 1, %s3
  %s6 = scalar_select 0, %s5, %s3
  $region1: #{tpu_custom_call.1} parent=0
    #allocation2 [shape = 'u8[65536]{0}', space=vmem, size = 0x10000, scoped, tag = 'input window, operand 0, single buffered']
    #allocation3 [shape = 's32[2]{0}', space=sflag, size = 0x8, scoped, tag = 'scoped memory for tpu_custom_call.1']
    #allocation4 [shape = 's32[2]{0}', space=sflag, size = 0x8, scoped, tag = 'scoped memory for tpu_custom_call.1']
    #allocation5 [shape = 'u8[65536]{0}', space=vmem, size = 0x10000, scoped, tag = 'input window, operand 1']
    #allocation6 [shape = 's32[2]{0}', space=sflag, size = 0x8, scoped, tag = 'scoped memory for tpu_custom_call.1']
    #allocation7 [shape = 'u8[16384]{0}', space=vmem, size = 0x4000, scoped, tag = 'output window, operand 0']
    %7 = vsyncpa [#allocation3], 0
    %8 = vsyncpa [#allocation6], 0
    %s9 = scalar_lea.sflag [#allocation6], 1
    %10 = vsyncpa %s9, 0
    %11 = vsyncpa [#allocation4], 0
    %s12 = scalar_lea.sflag [#allocation4], 1
    %13 = vsyncpa %s12, 0
    loop: start=0, step=1, limit=4
    $region2: #{tpu_custom_call.1} parent=1 // loop_pre_header
      _
    $region3: #{tpu_custom_call.1} parent=1 // loop_header
      %s15 = sphi 0, %s19
      %p16 = scmp.ge.s32.totalorder %s15, 4
      %s22 = sphi 0, %s34
      %s23 = sphi 0, %s30
      %s24 = sphi 0, %s22
      %s25 = sphi 0, %s23
      %s26 = sphi 0, %s24
      %s27 = sphi 0, %s25
      %s35 = sphi 0, %s35
      %s37 = sphi 0, %s35
      %s38 = sphi 0, %s37
      %s52 = sphi 0, %s38
      %s60 = sphi 0, %s62
      %s63 = sphi 0, %s60
      %s64 = sphi 0, %s63
      %s80 = sphi 0, %s64
      %s88 = sphi 0, %s90
      %s91 = sphi 0, %s88
      %s92 = sphi 0, %s91
      %s108 = sphi 0, %s92
    $region4: #{tpu_custom_call.1} parent=1 // loop_header_branch
      %18 = sbr.rel (%p16) target = $region8
    $region5: #{tpu_custom_call.1} parent=1 // loop_body
      %s20 = ssub.s32 %s15, 1
      %s21 = ssub.s32 %s15, 2
      %s28 = sadd.s32 1, %s23
      %p29 = scmp.ge.s32.totalorder %s28, 1
      %s30 = scalar_select %p29, 0, %s28
      %s31 = sadd.s32 1, %s22
      %s32 = scalar_select %p29, %s31, %s22
      %p33 = scmp.ge.s32.totalorder %s32, 2
      %s34 = scalar_select %p33, 0, %s32
      %s36 = sadd.s32 %s35, 1
      %p39 = scmp.eq.s32.totalorder %s15, 1
      %p40 = scmp.ne.s32.totalorder %s35, %s37
      %p41 = scmp.eq.s32.totalorder %s15, 0
      %p42 = por %p40, %p41
      %p43 = scmp.ne.s32.totalorder %s35, %s37
      %p44 = scmp.eq.s32.totalorder %s20, 1
      %p45 = por %p43, %p44
      %p46 = scmp.ne.s32.totalorder %s37, %s38
      %p47 = scmp.eq.s32.totalorder %s20, 0
      %p48 = por %p46, %p47
      %p49 = scmp.ne.s32.totalorder %s37, %s38
      %p50 = scmp.eq.s32.totalorder %s21, 1
      %p51 = por %p49, %p50
      %p53 = scmp.ne.s32.totalorder %s38, %s52
      %p54 = scmp.eq.s32.totalorder %s21, 0
      %p55 = por %p53, %p54
      %s56 = ssub.s32 %s22, %s34
      %s57 = ssub.s32 %s23, %s30
      %s58 = sor.u32 %s56, %s57
      %p59 = scmp.eq.s32.totalorder %s58, 0
      %s61 = sadd.s32 %s60, 1
      %s62 = scalar_select %p59, %s60, %s61
      %p65 = pneg %p59
      %p66 = scmp.eq.s32.totalorder %s15, 1
      %p67 = por %p65, %p66
      %p68 = scmp.ne.s32.totalorder %s60, %s63
      %p69 = scmp.eq.s32.totalorder %s15, 0
      %p70 = por %p68, %p69
      %p71 = scmp.ne.s32.totalorder %s60, %s63
      %p72 = scmp.eq.s32.totalorder %s20, 1
      %p73 = por %p71, %p72
      %p74 = scmp.ne.s32.totalorder %s63, %s64
      %p75 = scmp.eq.s32.totalorder %s20, 0
      %p76 = por %p74, %p75
      %p77 = scmp.ne.s32.totalorder %s63, %s64
      %p78 = scmp.eq.s32.totalorder %s21, 1
      %p79 = por %p77, %p78
      %p81 = scmp.ne.s32.totalorder %s64, %s80
      %p82 = scmp.eq.s32.totalorder %s21, 0
      %p83 = por %p81, %p82
      %s84 = ssub.s32 %s22, %s34
      %s85 = ssub.s32 %s23, %s30
      %s86 = sor.u32 %s84, %s85
      %p87 = scmp.eq.s32.totalorder %s86, 0
      %s89 = sadd.s32 %s88, 1
      %s90 = scalar_select %p87, %s88, %s89
      %p93 = pneg %p87
      %p94 = scmp.eq.s32.totalorder %s15, 1
      %p95 = por %p93, %p94
      %p96 = scmp.ne.s32.totalorder %s88, %s91
      %p97 = scmp.eq.s32.totalorder %s15, 0
      %p98 = por %p96, %p97
      %p99 = scmp.ne.s32.totalorder %s88, %s91
      %p100 = scmp.eq.s32.totalorder %s20, 1
      %p101 = por %p99, %p100
      %p102 = scmp.ne.s32.totalorder %s91, %s92
      %p103 = scmp.eq.s32.totalorder %s20, 0
      %p104 = por %p102, %p103
      %p105 = scmp.ne.s32.totalorder %s91, %s92
      %p106 = scmp.eq.s32.totalorder %s21, 1
      %p107 = por %p105, %p106
      %p109 = scmp.ne.s32.totalorder %s92, %s108
      %p110 = scmp.eq.s32.totalorder %s21, 0
      %p111 = por %p109, %p110
      %p112 = scmp.le.s32.totalorder 1, %s15
      %p113 = scmp.lt.s32.totalorder %s15, 3
      %p114 = pnand %p112, %p113
      %p115 = pneg %p114
      // Predicated region
      $region9: #{tpu_custom_call.1} parent=5 // pred_check
        _
      $region10: #{tpu_custom_call.1} parent=5 // pred_check_branch
        %117 = sbr.rel (%p114) target = $region12
      $region11: #{tpu_custom_call.1} parent=5 // pred_region
        %s118 = ssub.s32 %s15, 1
        // Predicated region
        $region13: #{tpu_custom_call.1} parent=11 // pred_check
          %p119 = pneg %p48
        $region14: #{tpu_custom_call.1} parent=11 // pred_check_branch
          %121 = sbr.rel (%p119) target = $region16
        $region15: #{tpu_custom_call.1} parent=11 // pred_region
          %123 = vsyncadd [#allocation3], 0
          %s124 = sshll.u32 %s0, 4
          %s125 = int_to_ptr.hbm [resolvable:$true] %s124
          %s126 = sshll.u32 [#allocation2], 4
          %s127 = int_to_ptr.vmem [resolvable:$true] %s126
          %132 = dma.hbm_to_vmem [thread:$0]  %s125, 2048, %s127, [#allocation3], 128, 128, 8
        $region16: #{tpu_custom_call.1} parent=11 // pred_fallthru
          _
      $region12: #{tpu_custom_call.1} parent=5 // pred_fallthru
        _
      %p133 = scmp.lt.s32.totalorder %s15, 2
      // Predicated region
      $region17: #{tpu_custom_call.1} parent=5 // pred_check
        %p134 = pneg %p133
      $region18: #{tpu_custom_call.1} parent=5 // pred_check_branch
        %136 = sbr.rel (%p134) target = $region20
      $region19: #{tpu_custom_call.1} parent=5 // pred_region
        // Predicated region
        $region21: #{tpu_custom_call.1} parent=19 // pred_check
          %p137 = pneg %p70
        $region22: #{tpu_custom_call.1} parent=19 // pred_check_branch
          %139 = sbr.rel (%p137) target = $region24
        $region23: #{tpu_custom_call.1} parent=19 // pred_region
          %s140 = sand.u32 %s60, 1
          %s141 = scalar_lea.sflag [#allocation6], %s140
          %s142 = sand.u32 %s60, 1
          %s143 = smul.addr %s142, 64
          %s144 = scalar_lea.vmem [#allocation5], %s143
          %s145 = smul.u32 2, %s23
          %147 = vsyncadd %s141, 0
          %s148 = smul.addr %s22, 8
          %s149 = sadd.s32 %s145, %s148
          %s150 = smul.addr %s149, 8
          %s151 = scalar_lea.hbm %s1, %s150
          %s152 = sshll.u32 %s151, 4
          %s153 = int_to_ptr.hbm [resolvable:$true] %s152
          %s154 = sshll.u32 %s144, 4
          %s155 = int_to_ptr.vmem [resolvable:$true] %s154
          %160 = dma.hbm_to_vmem [thread:$0]  %s153, 1024, %s155, %s141, 128, 128, 8
        $region24: #{tpu_custom_call.1} parent=19 // pred_fallthru
          _
      $region20: #{tpu_custom_call.1} parent=5 // pred_fallthru
        _
      %p161 = scmp.le.s32.totalorder 1, %s15
      %p162 = scmp.lt.s32.totalorder %s15, 3
      %p163 = pnand %p161, %p162
      %p164 = pneg %p163
      // Predicated region
      $region25: #{tpu_custom_call.1} parent=5 // pred_check
        _
      $region26: #{tpu_custom_call.1} parent=5 // pred_check_branch
        %166 = sbr.rel (%p163) target = $region28
      $region27: #{tpu_custom_call.1} parent=5 // pred_region
        %s167 = ssub.s32 %s15, 1
        // Predicated region
        $region29: #{tpu_custom_call.1} parent=27 // pred_check
          %p168 = pneg %p48
        $region30: #{tpu_custom_call.1} parent=27 // pred_check_branch
          %170 = sbr.rel (%p168) target = $region32
        $region31: #{tpu_custom_call.1} parent=27 // pred_region
          %172 = dma.done [#allocation3], 2048
        $region32: #{tpu_custom_call.1} parent=27 // pred_fallthru
          _
        %s173 = sand.u32 %s63, 1
        %s174 = scalar_lea.sflag [#allocation6], %s173
        %s175 = sand.u32 %s63, 1
        %s176 = smul.addr %s175, 64
        %s177 = scalar_lea.vmem [#allocation5], %s176
        // Predicated region
        $region33: #{tpu_custom_call.1} parent=27 // pred_check
          %p178 = pneg %p76
        $region34: #{tpu_custom_call.1} parent=27 // pred_check_branch
          %180 = sbr.rel (%p178) target = $region36
        $region35: #{tpu_custom_call.1} parent=27 // pred_region
          %182 = dma.done %s174, 1024
        $region36: #{tpu_custom_call.1} parent=27 // pred_fallthru
          _
        %p183 = pneg %p48
        %p184 = pneg %p45
        %s185 = sand.u32 %s63, 1
        %s186 = scalar_lea.sflag [#allocation6], %s185
        %s187 = sand.u32 %s63, 1
        %s188 = smul.addr %s187, 64
        %s189 = scalar_lea.vmem [#allocation5], %s188
        %p190 = pneg %p76
        %p191 = pneg %p73
        %p192 = pneg %p104
        %p193 = pneg %p101
        %s194 = sand.u32 %s91, 1
        %s195 = scalar_lea.sflag [#allocation4], %s194
        %s196 = sand.u32 %s91, 1
        %s197 = smul.addr %s196, 16
        %s198 = scalar_lea.vmem [#allocation7], %s197
        %s199 = smul.u32 2, %s25
        %s200 = smul.u32 2, %s25
        %v201 = vld [vmem:[%s177] sm:$0xff]
        %v202 = vld [vmem:[%s177 + $0x8] sm:$0xff]
        %v203 = vld [vmem:[%s177 + $0x10] sm:$0xff]
        %v204 = vld [vmem:[%s177 + $0x18] sm:$0xff]
        %v205 = vld [vmem:[%s177 + $0x20] sm:$0xff]
        %v206 = vld [vmem:[%s177 + $0x28] sm:$0xff]
        %v207 = vld [vmem:[%s177 + $0x30] sm:$0xff]
        %v208 = vld [vmem:[%s177 + $0x38] sm:$0xff]
        %v209 = vld [vmem:[#allocation2] sm:$0xff]
        %v210 = vld [vmem:[#allocation2 + $0x8] sm:$0xff]
        %v211 = vld [vmem:[#allocation2 + $0x10] sm:$0xff]
        %v212 = vld [vmem:[#allocation2 + $0x18] sm:$0xff]
        %v213 = vld [vmem:[#allocation2 + $0x20] sm:$0xff]
        %v214 = vld [vmem:[#allocation2 + $0x28] sm:$0xff]
        %v215 = vld [vmem:[#allocation2 + $0x30] sm:$0xff]
        %v216 = vld [vmem:[#allocation2 + $0x38] sm:$0xff]
        %v217 = vld [vmem:[#allocation2 + $0x40] sm:$0xff]
        %v218 = vld [vmem:[#allocation2 + $0x48] sm:$0xff]
        %v219 = vld [vmem:[#allocation2 + $0x50] sm:$0xff]
        %v220 = vld [vmem:[#allocation2 + $0x58] sm:$0xff]
        %v221 = vld [vmem:[#allocation2 + $0x60] sm:$0xff]
        %v222 = vld [vmem:[#allocation2 + $0x68] sm:$0xff]
        %v223 = vld [vmem:[#allocation2 + $0x70] sm:$0xff]
        %v224 = vld [vmem:[#allocation2 + $0x78] sm:$0xff]
        %vm225 = vcmask 261120
        %v227 = vsel %vm225, %v203, 0
        %v230 = vsel %vm225, %v204, 0
        %232 = vmatpush.msra.mxu0 0.0
        %233 = vmatpush.msra.mxu0 0.0
        %234 = vmatpush.msra.mxu0 0.0
        %235 = vmatpush.msra.mxu0 0.0
        %236 = vmatpush.msra.mxu0 0.0
        %237 = vmatpush.msra.mxu0 0.0
        %238 = vmatpush.msra.mxu0 0.0
        %239 = vmatpush.msra.mxu0 0.0
        %240 = vmatpush.msra.mxu0 0.0
        %241 = vmatpush.msra.mxu0 0.0
        %242 = vmatpush.msra.mxu0 0.0
        %243 = vmatpush.msra.mxu0 0.0
        %244 = vmatpush.msra.mxu0 %v216
        %245 = vmatpush.msra.mxu0 %v215
        %246 = vmatpush.msra.mxu0 %v214
        %247 = vmatpush.msra.mxu0 %v213
        %248 = vmatmul.f32.gmra.mxu0 %v227
        %v249 = vpop.f32.mrf.mxu0
        %v250 = vadd.f32 0.0, %v249
        %251 = vmatmul.f32.gmra.mxu0 %v230
        %v252 = vpop.f32.mrf.mxu0
        %v253 = vadd.f32 0.0, %v252
        %254 = vdwg.mxu0
        %v256 = vsel %vm225, %v201, 0
        %v259 = vsel %vm225, %v202, 0
        %261 = vmatpush.msra.mxu0 0.0
        %262 = vmatpush.msra.mxu0 0.0
        %263 = vmatpush.msra.mxu0 0.0
        %264 = vmatpush.msra.mxu0 0.0
        %265 = vmatpush.msra.mxu0 0.0
        %266 = vmatpush.msra.mxu0 0.0
        %267 = vmatpush.msra.mxu0 0.0
        %268 = vmatpush.msra.mxu0 0.0
        %269 = vmatpush.msra.mxu0 0.0
        %270 = vmatpush.msra.mxu0 0.0
        %271 = vmatpush.msra.mxu0 0.0
        %272 = vmatpush.msra.mxu0 0.0
        %273 = vmatpush.msra.mxu0 %v212
        %274 = vmatpush.msra.mxu0 %v211
        %275 = vmatpush.msra.mxu0 %v210
        %276 = vmatpush.msra.mxu0 %v209
        %277 = vmatmul.f32.gmra.mxu0 %v256
        %v278 = vpop.f32.mrf.mxu0
        %v279 = vadd.f32 %v250, %v278
        %280 = vmatmul.f32.gmra.mxu0 %v259
        %v281 = vpop.f32.mrf.mxu0
        %v282 = vadd.f32 %v253, %v281
        %283 = vdwg.mxu0
        %v285 = vsel %vm225, %v205, 0
        %v288 = vsel %vm225, %v206, 0
        %290 = vmatpush.msra.mxu0 0.0
        %291 = vmatpush.msra.mxu0 0.0
        %292 = vmatpush.msra.mxu0 0.0
        %293 = vmatpush.msra.mxu0 0.0
        %294 = vmatpush.msra.mxu0 0.0
        %295 = vmatpush.msra.mxu0 0.0
        %296 = vmatpush.msra.mxu0 0.0
        %297 = vmatpush.msra.mxu0 0.0
        %298 = vmatpush.msra.mxu0 0.0
        %299 = vmatpush.msra.mxu0 0.0
        %300 = vmatpush.msra.mxu0 0.0
        %301 = vmatpush.msra.mxu0 0.0
        %302 = vmatpush.msra.mxu0 %v220
        %303 = vmatpush.msra.mxu0 %v219
        %304 = vmatpush.msra.mxu0 %v218
        %305 = vmatpush.msra.mxu0 %v217
        %306 = vmatmul.f32.gmra.mxu0 %v285
        %v307 = vpop.f32.mrf.mxu0
        %v308 = vadd.f32 0.0, %v307
        %309 = vmatmul.f32.gmra.mxu0 %v288
        %v310 = vpop.f32.mrf.mxu0
        %v311 = vadd.f32 0.0, %v310
        %312 = vdwg.mxu0
        %v313 = vadd.f32 %v279, %v308
        %v314 = vadd.f32 %v282, %v311
        %v316 = vsel %vm225, %v207, 0
        %v319 = vsel %vm225, %v208, 0
        %321 = vmatpush.msra.mxu0 0.0
        %322 = vmatpush.msra.mxu0 0.0
        %323 = vmatpush.msra.mxu0 0.0
        %324 = vmatpush.msra.mxu0 0.0
        %325 = vmatpush.msra.mxu0 0.0
        %326 = vmatpush.msra.mxu0 0.0
        %327 = vmatpush.msra.mxu0 0.0
        %328 = vmatpush.msra.mxu0 0.0
        %329 = vmatpush.msra.mxu0 0.0
        %330 = vmatpush.msra.mxu0 0.0
        %331 = vmatpush.msra.mxu0 0.0
        %332 = vmatpush.msra.mxu0 0.0
        %333 = vmatpush.msra.mxu0 %v224
        %334 = vmatpush.msra.mxu0 %v223
        %335 = vmatpush.msra.mxu0 %v222
        %336 = vmatpush.msra.mxu0 %v221
        %337 = vmatmul.f32.gmra.mxu0 %v316
        %v338 = vpop.f32.mrf.mxu0
        %v339 = vadd.f32 0.0, %v338
        %340 = vmatmul.f32.gmra.mxu0 %v319
        %v341 = vpop.f32.mrf.mxu0
        %v342 = vadd.f32 0.0, %v341
        %343 = vdwg.mxu0
        %v344 = vadd.f32 %v313, %v339
        %v345 = vadd.f32 %v314, %v342
        %346 = vst [vmem:[%s198] sm:$0xff] %v344
        %347 = vst [vmem:[%s198 + $0x8] sm:$0xff] %v345
        %s348 = sand.u32 %s91, 1
        %s349 = scalar_lea.sflag [#allocation4], %s348
        %s350 = sand.u32 %s91, 1
        %s351 = smul.addr %s350, 16
        %s352 = scalar_lea.vmem [#allocation7], %s351
        // Predicated region
        $region37: #{tpu_custom_call.1} parent=27 // pred_check
          %p353 = pneg %p101
        $region38: #{tpu_custom_call.1} parent=27 // pred_check_branch
          %355 = sbr.rel (%p353) target = $region40
        $region39: #{tpu_custom_call.1} parent=27 // pred_region
          %s356 = smul.u32 2, %s25
          %358 = vsyncadd %s349, 0
          %s359 = smul.addr %s24, 2
          %s360 = sadd.s32 %s356, %s359
          %s361 = smul.addr %s360, 8
          %s362 = scalar_lea.hbm %s2, %s361
          %s363 = sshll.u32 %s352, 4
          %s364 = int_to_ptr.vmem [resolvable:$true] %s363
          %s365 = sshll.u32 %s362, 4
          %s366 = int_to_ptr.hbm [resolvable:$true] %s365
          %371 = dma.vmem_to_hbm [thread:$0]  %s364, 256, %s366, %s349, 128, 128, 8
        $region40: #{tpu_custom_call.1} parent=27 // pred_fallthru
          _
      $region28: #{tpu_custom_call.1} parent=5 // pred_fallthru
        _
      %p372 = scmp.le.s32.totalorder 2, %s15
      // Predicated region
      $region41: #{tpu_custom_call.1} parent=5 // pred_check
        %p373 = pneg %p372
      $region42: #{tpu_custom_call.1} parent=5 // pred_check_branch
        %375 = sbr.rel (%p373) target = $region44
      $region43: #{tpu_custom_call.1} parent=5 // pred_region
        %s376 = ssub.s32 %s15, 2
        // Predicated region
        $region45: #{tpu_custom_call.1} parent=43 // pred_check
          %p377 = pneg %p107
        $region46: #{tpu_custom_call.1} parent=43 // pred_check_branch
          %379 = sbr.rel (%p377) target = $region48
        $region47: #{tpu_custom_call.1} parent=43 // pred_region
          %s380 = sand.u32 %s92, 1
          %s381 = scalar_lea.sflag [#allocation4], %s380
          %s382 = sand.u32 %s92, 1
          %s383 = smul.addr %s382, 16
          %s384 = scalar_lea.vmem [#allocation7], %s383
          %386 = dma.done %s381, 256
        $region48: #{tpu_custom_call.1} parent=43 // pred_fallthru
          _
      $region44: #{tpu_custom_call.1} parent=5 // pred_fallthru
        _
    $region6: #{tpu_custom_call.1} parent=1 // loop_footer
      %s19 = sadd.s32 1, %s15
    $region7: #{tpu_custom_call.1} parent=1 // loop_footer_branch
      %14 = sbr.rel target = $region3
    $region8: #{tpu_custom_call.1} parent=1 // loop_exit
      _
    %387 = vsyncpa [#allocation3], 1
    %s388 = scalar_lea.sflag [#allocation3], 1
    %389 = vsyncpa %s388, 1
    %390 = vsyncpa [#allocation6], 1
    %s391 = scalar_lea.sflag [#allocation6], 1
    %392 = vsyncpa %s391, 1
    %393 = vsyncpa [#allocation4], 1
    %s394 = scalar_lea.sflag [#allocation4], 1
    %395 = vsyncpa %s394, 1

</llo_original>
